<compile_context>
chip_gen: v6e
topology: v6e:2x2x1
jax: 0.10.0
libtpu: 0.0.40
codegen_flags: <defaults>
</compile_context>

<pallas_src>
import functools

import jax
import jax.numpy as jnp
from jax.experimental import pallas as pl
from jax.experimental.pallas import tpu as pltpu


def get_padding(kernel_size, dilation=1):
    return int((kernel_size * dilation - dilation) / 2)


def _round_up(v, m):
    return ((v + m - 1) // m) * m


# ----------------------------------------------------------------------------
# Pallas kernel: one L-tile of a dense (stride-1, dilation-d) conv.
#   x_cur/x_nxt : [Cin, Lt]   current tile + next tile (halo)  (f32)
#   w_ref       : [Cout, K*Cin]  bf16, w[co, k*Cin + ci]
#   b_ref       : [Cout, 1]   f32
#   res_ref     : [Cout, Lt]  optional fused residual (f32)
#   o_ref       : [Cout, Lt]  f32
# ----------------------------------------------------------------------------
def _conv_block_kernel(*refs, K, dil, pre_lrelu, post_act, has_residual):
    if has_residual:
        x_cur, x_nxt, w_ref, b_ref, res_ref, o_ref = refs
    else:
        x_cur, x_nxt, w_ref, b_ref, o_ref = refs
        res_ref = None
    Cin = x_cur.shape[0]
    Lt = o_ref.shape[-1]

    # haloed window [Cin, 2*Lt]
    x = jnp.concatenate([x_cur[...], x_nxt[...]], axis=-1)
    if pre_lrelu:                                   # hoisted: once per block, not per tap
        x = jnp.where(x > 0, x, 0.1 * x)            # f32 VPU math
    xb = x.astype(jnp.bfloat16)                     # bf16 MXU operands

    # in-VMEM tap extraction -> single [K*Cin, Lt] contraction operand
    taps = jnp.concatenate(
        [xb[:, k * dil: k * dil + Lt] for k in range(K)], axis=0)

    acc = jnp.dot(w_ref[...], taps, preferred_element_type=jnp.float32)
    acc = acc + b_ref[...]
    if has_residual:
        acc = acc + res_ref[...]
    if post_act == "lrelu":
        acc = jnp.where(acc > 0, acc, 0.1 * acc)    # f32 epilogue
    elif post_act == "tanh":
        acc = jnp.tanh(acc)
    o_ref[...] = acc.astype(o_ref.dtype)


def _choose_lt(Cin, Cout, K, L_out, halo, budget_bytes=28 * 2 ** 20):
    """Largest 128-aligned L tile that fits a conservative VMEM budget."""
    w_bytes = 2 * (Cout * K * Cin) * 2                      # bf16 weights, 2 buffers
    budget = max(4 * 2 ** 20, budget_bytes - w_bytes)
    pipeline = 4 * (2 * Cin + 2 * Cout) * 2                 # f32 blocks, double buffered
    scratch = (4 + 2) * 2 * Cin + 2 * K * Cin + 4 * Cout    # in-kernel temporaries
    lt = (budget // max(pipeline + scratch, 1)) // 128 * 128
    lt = max(128, min(2048, lt))
    lt = max(lt, _round_up(max(halo, 1), 128))
    lt = min(lt, max(_round_up(L_out, 128), _round_up(max(halo, 1), 128)))
    return int(lt)


def _dense_conv(x, w2, b, *, K, dil, L_out, pre_lrelu=False, post_act="none",
                residual=None):
    """Dense stride-1 conv.  `x` is already padded so output q reads
    x[:, :, q + o*dil], o in [0, K).  x: [B, Cin, Lx] f32.  w2: [Cout, K*Cin].
    Returns [B, Cout, L_out] f32 (with optional fused residual/activations)."""
    B, Cin, Lx = x.shape
    Cout = w2.shape[0]
    halo = (K - 1) * dil
    Lt = _choose_lt(Cin, Cout, K, L_out, halo)
    nt = -(-L_out // Lt)
    Lpad = max((nt + 1) * Lt, _round_up(Lx, Lt))
    assert halo <= Lt and Lx <= Lpad
    x = jnp.pad(x, ((0, 0), (0, 0), (0, Lpad - Lx)))

    w2 = w2.astype(jnp.bfloat16)
    b2 = b.reshape(Cout, 1).astype(jnp.float32)

    in_specs = [
        pl.BlockSpec((None, Cin, Lt), lambda bb, j: (bb, 0, j)),      # current tile
        pl.BlockSpec((None, Cin, Lt), lambda bb, j: (bb, 0, j + 1)),  # halo tile
        pl.BlockSpec((Cout, K * Cin), lambda bb, j: (0, 0)),
        pl.BlockSpec((Cout, 1), lambda bb, j: (0, 0)),
    ]
    inputs = [x, x, w2, b2]
    if residual is not None:
        res = jnp.pad(residual.astype(jnp.float32),
                      ((0, 0), (0, 0), (0, nt * Lt - residual.shape[-1])))
        in_specs.append(pl.BlockSpec((None, Cout, Lt), lambda bb, j: (bb, 0, j)))
        inputs.append(res)

    # Scoped-VMEM limit: enough for this call's blocks, capped for v7x (64 MiB phys).
    vmem_need = (2 * (2 * Cin * Lt + (2 if residual is not None else 1) * Cout * Lt) * 4
                 + 2 * (Cout * K * Cin) * 2
                 + (4 + 2) * 2 * Cin * Lt + 2 * K * Cin * Lt + 4 * Cout * Lt)
    vmem_limit = int(min(48 * 2 ** 20, max(2 * vmem_need, 8 * 2 ** 20)))

    kernel = functools.partial(_conv_block_kernel, K=K, dil=dil,
                               pre_lrelu=pre_lrelu, post_act=post_act,
                               has_residual=residual is not None)
    out = pl.pallas_call(
        kernel,
        out_shape=jax.ShapeDtypeStruct((B, Cout, nt * Lt), jnp.float32),
        grid=(B, nt),
        in_specs=in_specs,
        out_specs=pl.BlockSpec((None, Cout, Lt), lambda bb, j: (bb, 0, j)),
        compiler_params=pltpu.CompilerParams(
            dimension_semantics=("parallel", "parallel"),
            vmem_limit_bytes=vmem_limit),
    )(*inputs)
    return out[:, :, :L_out]


# ----------------------------------------------------------------------------
# Conv wrappers (all reduce to the one dense Pallas kernel)
# ----------------------------------------------------------------------------
def conv1d(x, w, b, *, dilation=1, padding=0, pre_lrelu=False, post_act="none",
           residual=None):
    """Stride-1 Conv1d, NCL layout.  w: [Cout, Cin, K] (PyTorch layout)."""
    Cout, Cin, K = w.shape
    xp = jnp.pad(x, ((0, 0), (0, 0), (padding, padding)))
    L_out = xp.shape[-1] - (K - 1) * dilation
    w2 = jnp.transpose(w, (0, 2, 1)).reshape(Cout, K * Cin)
    return _dense_conv(xp, w2, b, K=K, dil=dilation, L_out=L_out,
                       pre_lrelu=pre_lrelu, post_act=post_act, residual=residual)


def conv1d_strided(x, w, b, *, stride, padding, post_act="none"):
    """Strided Conv1d via space-to-channel -> dense kernel (no K-fold HBM reads)."""
    if stride == 1:
        return conv1d(x, w, b, padding=padding, post_act=post_act)
    Cout, Cin, K = w.shape
    B = x.shape[0]
    xp = jnp.pad(x, ((0, 0), (0, 0), (padding, padding)))
    Lp = xp.shape[-1]
    L_out = (Lp - K) // stride + 1
    A = -(-K // stride)                            # taps after decomposition
    M = L_out - 1 + A
    need = M * stride
    xp = jnp.pad(xp, ((0, 0), (0, 0), (0, max(0, need - Lp))))[:, :, :need]
    z = xp.reshape(B, Cin, M, stride).transpose(0, 1, 3, 2).reshape(B, Cin * stride, M)
    wp = jnp.pad(w, ((0, 0), (0, 0), (0, A * stride - K)))
    w2 = wp.reshape(Cout, Cin, A, stride).transpose(0, 2, 1, 3).reshape(
        Cout, A * Cin * stride)
    return _dense_conv(z, w2, b, K=A, dil=1, L_out=L_out, post_act=post_act)


def conv_transpose1d(x, w, b, *, stride, padding, post_act="none"):
    """ConvTranspose1d via polyphase (no zero-stuffing). w: [Cin, Cout, K]."""
    Cin, Cout, K = w.shape
    B, _, L_in = x.shape
    s = stride
    assert padding <= K - 1
    L_out = (L_in - 1) * s + K - 2 * padding
    pad_eff = K - 1 - padding
    # flipped / channel-swapped weights: w_eff[k, co, ci] = w[ci, co, K-1-k]
    w_eff = jnp.transpose(w[:, :, ::-1], (2, 1, 0))

    k0 = [(pad_eff - r) % s for r in range(s)]
    T = [len(range(k0[r], K, s)) for r in range(s)]
    c = [(r + k0[r] - pad_eff) // s for r in range(s)]
    c_min, c_max = min(c), max(c)
    O = (c_max - c_min) + max(T)

    # all phases in one kernel call: Wc[r, o, co, ci]
    Wc = jnp.zeros((s, O, Cout, Cin), w.dtype)
    for r in range(s):
        for t in range(T[r]):
            Wc = Wc.at[r, c[r] - c_min + t].set(w_eff[k0[r] + t * s])
    W2 = Wc.transpose(0, 2, 1, 3).reshape(s * Cout, O * Cin)
    b_eff = jnp.tile(b, s)

    # x_adj[j] = x[j + c_min]
    if c_min < 0:
        x_adj = jnp.pad(x, ((0, 0), (0, 0), (-c_min, 0)))
    else:
        x_adj = x[:, :, c_min:]

    Lq = -(-L_out // s)
    y = _dense_conv(x_adj, W2, b_eff, K=O, dil=1, L_out=Lq, post_act=post_act)
    # interleave phases: y[:, r*Cout+co, q] -> out[:, co, q*s + r]
    # TODO(synk): interleave is XLA-side layout glue (lane-strided in-kernel stores
    # would be masked/slow); it is one cheap transpose per upsample layer.
    y = y.reshape(B, s, Cout, Lq).transpose(0, 2, 3, 1).reshape(B, Cout, Lq * s)
    return y[:, :, :L_out]


# ----------------------------------------------------------------------------
# Parameter construction (mirrors the PyTorch __init__ shapes; weight_norm is
# folded into the effective weights).
# ----------------------------------------------------------------------------
def build_params(key, cfg):
    keys = iter(jax.random.split(key, 256))

    def conv_p(cout, cin, k):
        return {"w": 0.01 * jax.random.normal(next(keys), (cout, cin, k), jnp.float32),
                "b": 0.01 * jax.random.normal(next(keys), (cout,), jnp.float32)}

    def convT_p(cin, cout, k):
        return {"w": 0.01 * jax.random.normal(next(keys), (cin, cout, k), jnp.float32),
                "b": 0.01 * jax.random.normal(next(keys), (cout,), jnp.float32)}

    C0 = cfg["upsample_initial_channels"]
    params = {"conv_pre": dict(conv_p(C0, cfg["n_mels"], 7), pad=3)}

    ups, downs_rev = [], []
    c2 = C0
    for i, (u, k) in enumerate(zip(cfg["upsample_rates"], cfg["upsample_kernel_sizes"])):
        c1 = C0 // 2 ** i
        c2 = C0 // 2 ** (i + 1)
        p = (k - u) // 2
        downs_rev.append(dict(conv_p(c1, c2, k), stride=u, pad=p))      # Conv1d(c2 -> c1)
        ups.append(dict(convT_p(c1, c2, k), stride=u, pad=p))           # ConvT(c1 -> c2)
    downs_rev.append(dict(conv_p(c2, 1, 7), stride=1, pad=3))
    params["downs"] = list(reversed(downs_rev))
    params["ups"] = ups

    resblocks = []
    ch = c2
    for i in range(len(ups)):
        ch = C0 // 2 ** (i + 1)
        for k, dils in zip(cfg["resblock_kernel_sizes"], cfg["resblock_dilations"]):
            convs1, convs2 = [], []
            for d in dils:
                convs1.append(dict(conv_p(ch, ch, k), dil=d, pad=get_padding(k, d)))
                convs2.append(dict(conv_p(ch, ch, k), dil=1, pad=get_padding(k, 1)))
            resblocks.append({"convs1": convs1, "convs2": convs2})
    params["resblocks"] = resblocks
    params["conv_post"] = dict(conv_p(cfg["output_channels"], ch, 7), pad=3)
    return params


# ----------------------------------------------------------------------------
# Forward pass (mirrors PeriodicHiFiGANFilter.forward with ResBlock1).
# ----------------------------------------------------------------------------
def resblock1_forward(rb, x):
    for c1, c2 in zip(rb["convs1"], rb["convs2"]):
        # lrelu -> c1 -> lrelu  fused in one kernel call
        xt = conv1d(x, c1["w"], c1["b"], dilation=c1["dil"], padding=c1["pad"],
                    pre_lrelu=True, post_act="lrelu")
        # c2 with the residual add (x + xt) fused into the epilogue
        x = conv1d(xt, c2["w"], c2["b"], dilation=c2["dil"], padding=c2["pad"],
                   residual=x)
    return x


def forward(params, x, source, cfg):
    num_kernels = len(cfg["resblock_kernel_sizes"])
    num_upsamples = len(cfg["upsample_rates"])

    # source (excitation) analysis chain: conv + leaky_relu fused per stage
    s = source
    source_signals = []
    for dp in params["downs"]:
        s = conv1d_strided(s, dp["w"], dp["b"], stride=dp["stride"],
                           padding=dp["pad"], post_act="lrelu")
        source_signals.append(s)
    source_signals = source_signals[::-1]

    # conv_pre with the first source-skip add fused into the epilogue
    x = conv1d(x, params["conv_pre"]["w"], params["conv_pre"]["b"],
               padding=params["conv_pre"]["pad"], residual=source_signals[0])

    for i in range(num_upsamples):
        if i > 0:
            x = x + source_signals[i]
        up = params["ups"][i]
        # ConvTranspose1d (polyphase) + leaky_relu fused
        x = conv_transpose1d(x, up["w"], up["b"], stride=up["stride"],
                             padding=up["pad"], post_act="lrelu")
        xs = None
        for j in range(num_kernels):
            y = resblock1_forward(params["resblocks"][i * num_kernels + j], x)
            xs = y if xs is None else xs + y
        x = xs / num_kernels   # TODO(synk): small elementwise op left to XLA fusion

    x = x + source_signals[-1]
    # lrelu + conv_post + tanh fused in one kernel call
    x = conv1d(x, params["conv_post"]["w"], params["conv_post"]["b"],
               padding=params["conv_post"]["pad"], pre_lrelu=True,
               post_act="tanh")
    return x


if __name__ == "__main__":
    # Small but structurally faithful configuration.
    cfg = dict(
        n_mels=8,
        upsample_initial_channels=32,
        resblock_kernel_sizes=[3, 5],
        resblock_dilations=[[1, 3], [1, 3]],
        upsample_kernel_sizes=[4, 4],
        upsample_rates=[2, 2],
        output_channels=1,
    )
    frame_size = 1
    for u in cfg["upsample_rates"]:
        frame_size *= u  # = 4

    key = jax.random.PRNGKey(0)
    kp, kx, ks = jax.random.split(key, 3)
    params = build_params(kp, cfg)

    B, T = 2, 16
    x = jax.random.normal(kx, (B, cfg["n_mels"], T), jnp.float32)            # mel features
    source = jax.random.normal(ks, (B, 1, T * frame_size), jnp.float32)      # excitation

    out = forward(params, x, source, cfg)
    out = jax.block_until_ready(out)
    assert out.shape == (B, cfg["output_channels"], T * frame_size), out.shape
    assert bool(jnp.all(jnp.isfinite(out)))
    print("KERNEL_OK")
</pallas_src>

<mosaic_0001>
module attributes {stable_mosaic.version = 11 : i64} {
  func.func @_conv_block_kernel(%arg0: i32, %arg1: i32, %arg2: memref<1x1x128xf32, #tpu.memory_space<vmem>>, %arg3: memref<1x1x128xf32, #tpu.memory_space<vmem>>, %arg4: memref<8x7xbf16, #tpu.memory_space<vmem>>, %arg5: memref<8x1xf32, #tpu.memory_space<vmem>>, %arg6: memref<1x8x128xf32, #tpu.memory_space<vmem>>) attributes {dimension_semantics = [#tpu.dimension_semantics<parallel>, #tpu.dimension_semantics<parallel>], iteration_bounds = array<i64: 2, 1>, scalar_prefetch = 0 : i64, scratch_operands = 0 : i64, tpu.core_type = #tpu.core_type<tc>, window_params = [{transform_indices = @transform_0, window_bounds = array<i64: 1, 1, 128>}, {transform_indices = @transform_1, window_bounds = array<i64: 1, 1, 128>}, {pipeline_mode = #tpu.pipeline_mode<synchronous>, transform_indices = @transform_2, window_bounds = array<i64: 8, 7>}, {pipeline_mode = #tpu.pipeline_mode<synchronous>, transform_indices = @transform_3, window_bounds = array<i64: 8, 1>}, {transform_indices = @transform_4, window_bounds = array<i64: 1, 8, 128>}]} {
    %c0 = arith.constant 0 : index
    %c0_0 = arith.constant 0 : index
    %c0_1 = arith.constant 0 : index
    %0 = vector.load %arg2[%c0, %c0_0, %c0_1] : memref<1x1x128xf32, #tpu.memory_space<vmem>>, vector<1x1x128xf32>
    %1 = vector.shape_cast %0 : vector<1x1x128xf32> to vector<1x128xf32>
    %c0_2 = arith.constant 0 : index
    %c0_3 = arith.constant 0 : index
    %c0_4 = arith.constant 0 : index
    %2 = vector.load %arg3[%c0_2, %c0_3, %c0_4] : memref<1x1x128xf32, #tpu.memory_space<vmem>>, vector<1x1x128xf32>
    %3 = vector.shape_cast %2 : vector<1x1x128xf32> to vector<1x128xf32>
    %4 = tpu.concatenate %1, %3 in 1 : vector<1x128xf32>, vector<1x128xf32> -> vector<1x256xf32>
    %5 = arith.truncf %4 : vector<1x256xf32> to vector<1x256xbf16>
    %6 = vector.extract_strided_slice %5 {offsets = [0, 0], sizes = [1, 128], strides = [1, 1]} : vector<1x256xbf16> to vector<1x128xbf16>
    %7 = vector.extract_strided_slice %5 {offsets = [0, 1], sizes = [1, 128], strides = [1, 1]} : vector<1x256xbf16> to vector<1x128xbf16>
    %8 = vector.extract_strided_slice %5 {offsets = [0, 2], sizes = [1, 128], strides = [1, 1]} : vector<1x256xbf16> to vector<1x128xbf16>
    %9 = vector.extract_strided_slice %5 {offsets = [0, 3], sizes = [1, 128], strides = [1, 1]} : vector<1x256xbf16> to vector<1x128xbf16>
    %10 = vector.extract_strided_slice %5 {offsets = [0, 4], sizes = [1, 128], strides = [1, 1]} : vector<1x256xbf16> to vector<1x128xbf16>
    %11 = vector.extract_strided_slice %5 {offsets = [0, 5], sizes = [1, 128], strides = [1, 1]} : vector<1x256xbf16> to vector<1x128xbf16>
    %12 = vector.extract_strided_slice %5 {offsets = [0, 6], sizes = [1, 128], strides = [1, 1]} : vector<1x256xbf16> to vector<1x128xbf16>
    %13 = tpu.concatenate %6, %7, %8, %9, %10, %11, %12 in 0 : vector<1x128xbf16>, vector<1x128xbf16>, vector<1x128xbf16>, vector<1x128xbf16>, vector<1x128xbf16>, vector<1x128xbf16>, vector<1x128xbf16> -> vector<7x128xbf16>
    %c0_5 = arith.constant 0 : index
    %c0_6 = arith.constant 0 : index
    %14 = vector.load %arg4[%c0_5, %c0_6] : memref<8x7xbf16, #tpu.memory_space<vmem>>, vector<8x7xbf16>
    %cst = arith.constant dense<0.000000e+00> : vector<8x128xf32>
    %15 = tpu.matmul %14, %13, %cst {dimension_numbers = #tpu.dot_dimension_numbers<[1], [0], [0], [1], [0, 0, 1, 1], [], []>} : vector<8x7xbf16>, vector<7x128xbf16>, vector<8x128xf32> -> vector<8x128xf32>
    %c0_7 = arith.constant 0 : index
    %c0_8 = arith.constant 0 : index
    %16 = vector.load %arg5[%c0_7, %c0_8] : memref<8x1xf32, #tpu.memory_space<vmem>>, vector<8x1xf32>
    %17 = vector.broadcast %16 : vector<8x1xf32> to vector<8x128xf32>
    %18 = arith.addf %15, %17 : vector<8x128xf32>
    %cst_9 = arith.constant 0.000000e+00 : f32
    %19 = vector.broadcast %cst_9 : f32 to vector<8x128xf32>
    %20 = arith.cmpf ogt, %18, %19 : vector<8x128xf32>
    %cst_10 = arith.constant 1.000000e-01 : f32
    %21 = vector.broadcast %cst_10 : f32 to vector<8x128xf32>
    %22 = arith.mulf %21, %18 : vector<8x128xf32>
    %23 = arith.select %20, %18, %22 : vector<8x128xi1>, vector<8x128xf32>
    %c0_11 = arith.constant 0 : index
    %c0_12 = arith.constant 0 : index
    %c0_13 = arith.constant 0 : index
    %24 = vector.load %arg6[%c0_11, %c0_12, %c0_13] : memref<1x8x128xf32, #tpu.memory_space<vmem>>, vector<1x8x128xf32>
    %25 = vector.shape_cast %24 : vector<1x8x128xf32> to vector<8x128xf32>
    %26 = vector.shape_cast %23 : vector<8x128xf32> to vector<1x8x128xf32>
    tpu.vector_store %arg6[%c0_11, %c0_12, %c0_13], %26 {strides = array<i32>} : memref<1x8x128xf32, #tpu.memory_space<vmem>>, vector<1x8x128xf32>,
    return
  }
  func.func @transform_0(%arg0: i32, %arg1: i32) -> (i32, i32, i32) {
    %c0_i32 = arith.constant 0 : i32
    %c0_i32_0 = arith.constant 0 : i32
    return %arg0, %c0_i32, %arg1 : i32, i32, i32
  }
  func.func @transform_1(%arg0: i32, %arg1: i32) -> (i32, i32, i32) {
    %c1_i32 = arith.constant 1 : i32
    %0 = arith.addi %arg1, %c1_i32 : i32
    %c0_i32 = arith.constant 0 : i32
    %c0_i32_0 = arith.constant 0 : i32
    return %arg0, %c0_i32, %0 : i32, i32, i32
  }
  func.func @transform_2(%arg0: i32, %arg1: i32) -> (i32, i32) {
    %c0_i32 = arith.constant 0 : i32
    %c0_i32_0 = arith.constant 0 : i32
    %c0_i32_1 = arith.constant 0 : i32
    return %c0_i32, %c0_i32_0 : i32, i32
  }
  func.func @transform_3(%arg0: i32, %arg1: i32) -> (i32, i32) {
    %c0_i32 = arith.constant 0 : i32
    %c0_i32_0 = arith.constant 0 : i32
    %c0_i32_1 = arith.constant 0 : i32
    return %c0_i32, %c0_i32_0 : i32, i32
  }
  func.func @transform_4(%arg0: i32, %arg1: i32) -> (i32, i32, i32) {
    %c0_i32 = arith.constant 0 : i32
    %c0_i32_0 = arith.constant 0 : i32
    return %arg0, %c0_i32, %arg1 : i32, i32, i32
  }
}

</mosaic_0001>

<llo_original>
// kernel: tpu_custom_call.1
$region0: #{tpu_custom_call.1}
  #allocation0 [shape = 'u32[]', space=smem, size = 0x4, offset = 0x4, fixed_abs, tag = 'smem constant byte address 0x4 - core index']
  #allocation1 [shape = 'u32[144,128]{1,0:T(1,128)}', space=vmem, size = 0x12000, scoped, tag = 'internal scratch']
  %s0 = inlined_call_operand.vmem [shape: f32[2,1,256], index: 0, kind: input, shape index: {}]
  %s1 = inlined_call_operand.vmem [shape: f32[2,1,256], index: 1, kind: input, shape index: {}]
  %s2 = inlined_call_operand.vmem [shape: bf16[8,7], index: 2, kind: input, shape index: {}]
  %s3 = inlined_call_operand.vmem [shape: f32[8,1], index: 3, kind: input, shape index: {}]
  %s4 = inlined_call_operand.hbm [shape: f32[2,8,128], index: 4, kind: output, shape index: {}]
  %s5 = sld [smem:[#allocation0]]
  $region49: #{tpu_custom_call.1} parent=0
    _
  %s7 = ssub.s32 1, %s5
  %s8 = scalar_select 0, %s7, %s5
  $region1: #{tpu_custom_call.1} parent=0
    #allocation2 [shape = 'u8[8192]{0}', space=vmem, size = 0x2000, scoped, tag = 'output window, operand 0']
    #allocation3 [shape = 's32[2]{0}', space=sflag, size = 0x8, scoped, tag = 'scoped memory for tpu_custom_call.1']
    %9 = vsyncpa [#allocation3], 0
    %s10 = scalar_lea.sflag [#allocation3], 1
    %11 = vsyncpa %s10, 0
    loop: start=0, step=1, limit=4
    $region2: #{tpu_custom_call.1} parent=1 // loop_pre_header
      _
    $region3: #{tpu_custom_call.1} parent=1 // loop_header
      %s13 = sphi 0, %s17
      %p14 = scmp.ge.s32.totalorder %s13, 4
      %s20 = sphi 0, %s32
      %s21 = sphi 0, %s28
      %s22 = sphi 0, %s20
      %s23 = sphi 0, %s21
      %s24 = sphi 0, %s22
      %s25 = sphi 0, %s23
      %s37 = sphi 0, %s39
      %s40 = sphi 0, %s37
      %s41 = sphi 0, %s40
      %s57 = sphi 0, %s41
      %s67 = sphi 0, %s69
      %s70 = sphi 0, %s67
      %s71 = sphi 0, %s70
      %s87 = sphi 0, %s71
      %s91 = sphi 0, %s91
      %s93 = sphi 0, %s91
      %s94 = sphi 0, %s93
      %s108 = sphi 0, %s94
      %s112 = sphi 0, %s112
      %s114 = sphi 0, %s112
      %s115 = sphi 0, %s114
      %s129 = sphi 0, %s115
      %s137 = sphi 0, %s139
      %s140 = sphi 0, %s137
      %s141 = sphi 0, %s140
      %s157 = sphi 0, %s141
    $region4: #{tpu_custom_call.1} parent=1 // loop_header_branch
      %16 = sbr.rel (%p14) target = $region8
    $region5: #{tpu_custom_call.1} parent=1 // loop_body
      %s18 = ssub.s32 %s13, 1
      %s19 = ssub.s32 %s13, 2
      %s26 = sadd.s32 1, %s21
      %p27 = scmp.ge.s32.totalorder %s26, 1
      %s28 = scalar_select %p27, 0, %s26
      %s29 = sadd.s32 1, %s20
      %s30 = scalar_select %p27, %s29, %s20
      %p31 = scmp.ge.s32.totalorder %s30, 2
      %s32 = scalar_select %p31, 0, %s30
      %s33 = ssub.s32 %s20, %s32
      %s34 = ssub.s32 %s21, %s28
      %s35 = sor.u32 %s33, %s34
      %p36 = scmp.eq.s32.totalorder %s35, 0
      %s38 = sadd.s32 %s37, 1
      %s39 = scalar_select %p36, %s37, %s38
      %p42 = pneg %p36
      %p43 = scmp.eq.s32.totalorder %s13, 1
      %p44 = por %p42, %p43
      %p45 = scmp.ne.s32.totalorder %s37, %s40
      %p46 = scmp.eq.s32.totalorder %s13, 0
      %p47 = por %p45, %p46
      %p48 = scmp.ne.s32.totalorder %s37, %s40
      %p49 = scmp.eq.s32.totalorder %s18, 1
      %p50 = por %p48, %p49
      %p51 = scmp.ne.s32.totalorder %s40, %s41
      %p52 = scmp.eq.s32.totalorder %s18, 0
      %p53 = por %p51, %p52
      %p54 = scmp.ne.s32.totalorder %s40, %s41
      %p55 = scmp.eq.s32.totalorder %s19, 1
      %p56 = por %p54, %p55
      %p58 = scmp.ne.s32.totalorder %s41, %s57
      %p59 = scmp.eq.s32.totalorder %s19, 0
      %p60 = por %p58, %p59
      %s61 = sadd.s32 %s21, 1
      %s62 = sadd.s32 %s28, 1
      %s63 = ssub.s32 %s20, %s32
      %s64 = ssub.s32 %s61, %s62
      %s65 = sor.u32 %s63, %s64
      %p66 = scmp.eq.s32.totalorder %s65, 0
      %s68 = sadd.s32 %s67, 1
      %s69 = scalar_select %p66, %s67, %s68
      %p72 = pneg %p66
      %p73 = scmp.eq.s32.totalorder %s13, 1
      %p74 = por %p72, %p73
      %p75 = scmp.ne.s32.totalorder %s67, %s70
      %p76 = scmp.eq.s32.totalorder %s13, 0
      %p77 = por %p75, %p76
      %p78 = scmp.ne.s32.totalorder %s67, %s70
      %p79 = scmp.eq.s32.totalorder %s18, 1
      %p80 = por %p78, %p79
      %p81 = scmp.ne.s32.totalorder %s70, %s71
      %p82 = scmp.eq.s32.totalorder %s18, 0
      %p83 = por %p81, %p82
      %p84 = scmp.ne.s32.totalorder %s70, %s71
      %p85 = scmp.eq.s32.totalorder %s19, 1
      %p86 = por %p84, %p85
      %p88 = scmp.ne.s32.totalorder %s71, %s87
      %p89 = scmp.eq.s32.totalorder %s19, 0
      %p90 = por %p88, %p89
      %s92 = sadd.s32 %s91, 1
      %p95 = scmp.eq.s32.totalorder %s13, 1
      %p96 = scmp.ne.s32.totalorder %s91, %s93
      %p97 = scmp.eq.s32.totalorder %s13, 0
      %p98 = por %p96, %p97
      %p99 = scmp.ne.s32.totalorder %s91, %s93
      %p100 = scmp.eq.s32.totalorder %s18, 1
      %p101 = por %p99, %p100
      %p102 = scmp.ne.s32.totalorder %s93, %s94
      %p103 = scmp.eq.s32.totalorder %s18, 0
      %p104 = por %p102, %p103
      %p105 = scmp.ne.s32.totalorder %s93, %s94
      %p106 = scmp.eq.s32.totalorder %s19, 1
      %p107 = por %p105, %p106
      %p109 = scmp.ne.s32.totalorder %s94, %s108
      %p110 = scmp.eq.s32.totalorder %s19, 0
      %p111 = por %p109, %p110
      %s113 = sadd.s32 %s112, 1
      %p116 = scmp.eq.s32.totalorder %s13, 1
      %p117 = scmp.ne.s32.totalorder %s112, %s114
      %p118 = scmp.eq.s32.totalorder %s13, 0
      %p119 = por %p117, %p118
      %p120 = scmp.ne.s32.totalorder %s112, %s114
      %p121 = scmp.eq.s32.totalorder %s18, 1
      %p122 = por %p120, %p121
      %p123 = scmp.ne.s32.totalorder %s114, %s115
      %p124 = scmp.eq.s32.totalorder %s18, 0
      %p125 = por %p123, %p124
      %p126 = scmp.ne.s32.totalorder %s114, %s115
      %p127 = scmp.eq.s32.totalorder %s19, 1
      %p128 = por %p126, %p127
      %p130 = scmp.ne.s32.totalorder %s115, %s129
      %p131 = scmp.eq.s32.totalorder %s19, 0
      %p132 = por %p130, %p131
      %s133 = ssub.s32 %s20, %s32
      %s134 = ssub.s32 %s21, %s28
      %s135 = sor.u32 %s133, %s134
      %p136 = scmp.eq.s32.totalorder %s135, 0
      %s138 = sadd.s32 %s137, 1
      %s139 = scalar_select %p136, %s137, %s138
      %p142 = pneg %p136
      %p143 = scmp.eq.s32.totalorder %s13, 1
      %p144 = por %p142, %p143
      %p145 = scmp.ne.s32.totalorder %s137, %s140
      %p146 = scmp.eq.s32.totalorder %s13, 0
      %p147 = por %p145, %p146
      %p148 = scmp.ne.s32.totalorder %s137, %s140
      %p149 = scmp.eq.s32.totalorder %s18, 1
      %p150 = por %p148, %p149
      %p151 = scmp.ne.s32.totalorder %s140, %s141
      %p152 = scmp.eq.s32.totalorder %s18, 0
      %p153 = por %p151, %p152
      %p154 = scmp.ne.s32.totalorder %s140, %s141
      %p155 = scmp.eq.s32.totalorder %s19, 1
      %p156 = por %p154, %p155
      %p158 = scmp.ne.s32.totalorder %s141, %s157
      %p159 = scmp.eq.s32.totalorder %s19, 0
      %p160 = por %p158, %p159
      %p161 = scmp.le.s32.totalorder 1, %s13
      %p162 = scmp.lt.s32.totalorder %s13, 3
      %p163 = pnand %p161, %p162
      %p164 = pneg %p163
      // Predicated region
      $region9: #{tpu_custom_call.1} parent=5 // pred_check
        _
      $region10: #{tpu_custom_call.1} parent=5 // pred_check_branch
        %166 = sbr.rel (%p163) target = $region12
      $region11: #{tpu_custom_call.1} parent=5 // pred_region
        %s167 = ssub.s32 %s13, 1
        // Predicated region
        $region13: #{tpu_custom_call.1} parent=11 // pred_check
          %p168 = pneg %p104
        $region14: #{tpu_custom_call.1} parent=11 // pred_check_branch
          %170 = sbr.rel (%p168) target = $region16
        $region15: #{tpu_custom_call.1} parent=11 // pred_region
          _
        $region16: #{tpu_custom_call.1} parent=11 // pred_fallthru
          _
        // Predicated region
        $region17: #{tpu_custom_call.1} parent=11 // pred_check
          %p171 = pneg %p125
        $region18: #{tpu_custom_call.1} parent=11 // pred_check_branch
          %173 = sbr.rel (%p171) target = $region20
        $region19: #{tpu_custom_call.1} parent=11 // pred_region
          _
        $region20: #{tpu_custom_call.1} parent=11 // pred_fallthru
          _
      $region12: #{tpu_custom_call.1} parent=5 // pred_fallthru
        _
      %p174 = scmp.lt.s32.totalorder %s13, 2
      // Predicated region
      $region21: #{tpu_custom_call.1} parent=5 // pred_check
        %p175 = pneg %p174
      $region22: #{tpu_custom_call.1} parent=5 // pred_check_branch
        %177 = sbr.rel (%p175) target = $region24
      $region23: #{tpu_custom_call.1} parent=5 // pred_region
        // Predicated region
        $region25: #{tpu_custom_call.1} parent=23 // pred_check
          %p178 = pneg %p47
        $region26: #{tpu_custom_call.1} parent=23 // pred_check_branch
          %180 = sbr.rel (%p178) target = $region28
        $region27: #{tpu_custom_call.1} parent=23 // pred_region
          %p181 = scmp.lt.s32.totalorder %s20, 1
          %s182 = scalar_select %p181, %s20, 1
          %p183 = scmp.lt.s32.totalorder %s21, 1
          %s184 = scalar_select %p183, %s21, 1
          %s185 = smul.addr %s182, 2
          %s186 = sadd.s32 %s184, %s185
          %s187 = scalar_lea.vmem %s0, %s186
        $region28: #{tpu_custom_call.1} parent=23 // pred_fallthru
          _
        // Predicated region
        $region29: #{tpu_custom_call.1} parent=23 // pred_check
          %p188 = pneg %p77
        $region30: #{tpu_custom_call.1} parent=23 // pred_check_branch
          %190 = sbr.rel (%p188) target = $region32
        $region31: #{tpu_custom_call.1} parent=23 // pred_region
          %s191 = sadd.s32 %s21, 1
          %p192 = scmp.lt.s32.totalorder %s20, 1
          %s193 = scalar_select %p192, %s20, 1
          %p194 = scmp.lt.s32.totalorder %s191, 1
          %s195 = scalar_select %p194, %s191, 1
          %s196 = smul.addr %s193, 2
          %s197 = sadd.s32 %s195, %s196
          %s198 = scalar_lea.vmem %s1, %s197
          %s199 = sadd.s32 %s21, 1
        $region32: #{tpu_custom_call.1} parent=23 // pred_fallthru
          _
      $region24: #{tpu_custom_call.1} parent=5 // pred_fallthru
        _
      %p200 = scmp.le.s32.totalorder 1, %s13
      %p201 = scmp.lt.s32.totalorder %s13, 3
      %p202 = pnand %p200, %p201
      %p203 = pneg %p202
      // Predicated region
      $region33: #{tpu_custom_call.1} parent=5 // pred_check
        _
      $region34: #{tpu_custom_call.1} parent=5 // pred_check_branch
        %205 = sbr.rel (%p202) target = $region36
      $region35: #{tpu_custom_call.1} parent=5 // pred_region
        %s206 = ssub.s32 %s13, 1
        %p207 = scmp.lt.s32.totalorder %s22, 1
        %s208 = scalar_select %p207, %s22, 1
        %p209 = scmp.lt.s32.totalorder %s23, 1
        %s210 = scalar_select %p209, %s23, 1
        %s211 = smul.addr %s208, 2
        %s212 = sadd.s32 %s210, %s211
        %s213 = scalar_lea.vmem %s0, %s212
        %p214 = pneg %p53
        %p215 = pneg %p50
        %s216 = sadd.s32 %s23, 1
        %p217 = scmp.lt.s32.totalorder %s22, 1
        %s218 = scalar_select %p217, %s22, 1
        %p219 = scmp.lt.s32.totalorder %s216, 1
        %s220 = scalar_select %p219, %s216, 1
        %s221 = smul.addr %s218, 2
        %s222 = sadd.s32 %s220, %s221
        %s223 = scalar_lea.vmem %s1, %s222
        %p224 = pneg %p83
        %p225 = pneg %p80
        %p226 = pneg %p104
        %p227 = pneg %p101
        %p228 = pneg %p125
        %p229 = pneg %p122
        %p230 = pneg %p153
        %p231 = pneg %p150
        %s232 = sand.u32 %s140, 1
        %s233 = scalar_lea.sflag [#allocation3], %s232
        %s234 = sand.u32 %s140, 1
        %s235 = smul.addr %s234, 8
        %s236 = scalar_lea.vmem [#allocation2], %s235
        %p237 = scmp.lt.s32.totalorder %s22, 1
        %s238 = scalar_select %p237, %s22, 1
        %p239 = scmp.lt.s32.totalorder %s23, 1
        %s240 = scalar_select %p239, %s23, 1
        %s241 = smul.addr %s238, 2
        %s242 = sadd.s32 %s240, %s241
        %s243 = scalar_lea.vmem %s0, %s242
        %s244 = sadd.s32 %s23, 1
        %p245 = scmp.lt.s32.totalorder %s22, 1
        %s246 = scalar_select %p245, %s22, 1
        %p247 = scmp.lt.s32.totalorder %s244, 1
        %s248 = scalar_select %p247, %s244, 1
        %s249 = smul.addr %s246, 2
        %s250 = sadd.s32 %s248, %s249
        %s251 = scalar_lea.vmem %s1, %s250
        %s252 = sadd.s32 %s23, 1
        %v254 = vld [vmem:[%s243] sm:$0x1]
        %v255 = vld [vmem:[%s251] sm:$0x1]
        %v256 = vpack.c.bf16 %v254, %v254
        %v257 = vpack.c.bf16 %v255, %v255
        %v259 = vshll.u32 %v256, 16
        %v262 = vshll.u32 %v257, 16
        %264 = vrot.lane.b32.xlu0 %v259, 127
        %v265 = vpop.permute.xlu0 %264
        %266 = vrot.lane.b32.xlu0 %v262, 127
        %v267 = vpop.permute.xlu0 %266
        %vm268 = vcmask 1039360
        %v269 = vsel %vm268, %v265, %v267
        %v273 = vrot.slane %v256, 7
        %v274 = vrot.slane %v257, 7
        %275 = vrot.lane.b32.xlu0 %v273, 126
        %v276 = vpop.permute.xlu0 %275
        %277 = vrot.lane.b32.xlu0 %v274, 126
        %v278 = vpop.permute.xlu0 %277
        %vm279 = vcmask 1031168
        %v280 = vsel %vm279, %v276, %v278
        %v281 = vrot.slane %v259, 7
        %v282 = vrot.slane %v262, 7
        %283 = vrot.lane.b32.xlu0 %v281, 125
        %v284 = vpop.permute.xlu0 %283
        %285 = vrot.lane.b32.xlu0 %v282, 125
        %v286 = vpop.permute.xlu0 %285
        %vm287 = vcmask 1022976
        %v288 = vsel %vm287, %v284, %v286
        %v290 = vrot.slane %v256, 6
        %v291 = vrot.slane %v257, 6
        %292 = vrot.lane.b32.xlu0 %v290, 124
        %v293 = vpop.permute.xlu0 %292
        %294 = vrot.lane.b32.xlu0 %v291, 124
        %v295 = vpop.permute.xlu0 %294
        %vm296 = vcmask 1014784
        %v297 = vsel %vm296, %v293, %v295
        %v298 = vrot.slane %v259, 6
        %v299 = vrot.slane %v262, 6
        %300 = vrot.lane.b32.xlu0 %v298, 123
        %v301 = vpop.permute.xlu0 %300
        %302 = vrot.lane.b32.xlu0 %v299, 123
        %v303 = vpop.permute.xlu0 %302
        %vm304 = vcmask 1006592
        %v305 = vsel %vm304, %v301, %v303
        %v307 = vrot.slane %v256, 5
        %v308 = vrot.slane %v257, 5
        %309 = vrot.lane.b32.xlu0 %v307, 122
        %v310 = vpop.permute.xlu0 %309
        %311 = vrot.lane.b32.xlu0 %v308, 122
        %v312 = vpop.permute.xlu0 %311
        %vm313 = vcmask 998400
        %v314 = vsel %vm313, %v310, %v312
        %vm315 = vcmask 1040384
        %vm316 = vsmask.f32 256
        %vm317 = vmand %vm315, %vm316
        %v318 = vsel %vm317, %v256, %v269
        %vm319 = vcmask 1040384
        %v322 = vsel %vm319, %v318, %v280
        %vm324 = vcmask 1041408
        %vm325 = vsmask.f32 1280
        %vm326 = vmand %vm324, %vm325
        %v327 = vsel %vm326, %v322, %v288
        %vm328 = vcmask 1041408
        %v331 = vsel %vm328, %v327, %v297
        %vm333 = vcmask 1042432
        %vm334 = vsmask.f32 2304
        %vm335 = vmand %vm333, %vm334
        %v336 = vsel %vm335, %v331, %v305
        %vm337 = vcmask 1042432
        %v340 = vsel %vm337, %v336, %v314
        %v341 = vld [vmem:[%s2] sm:$0xf]
        %v342 = vld [vmem:[%s3] sm:$0xff]
        %344 = vset.pattern.permute.xlu0 0
        %345 = vperm.xlu0 %344, %v342
        %v346 = vpop.permute.xlu0 %345
        %vm348 = vcmask 56320
        %v350 = vsel %vm348, %v341, 0
        %vm352 = vcmask 1043456
        %v353 = vsel %vm337, 4294967295, 65535
        %v354 = vsel %vm352, %v353, 0
        %v355 = vand.u32 %v340, %v354
        %357 = vmatprep.subr.bf16.mxu0 0
        %358 = vmatpush1.bf16.msra.mxu0 0
        %359 = vmatprep.subr.bf16.mxu0 0
        %360 = vmatpush1.bf16.msra.mxu0 0
        %361 = vmatprep.subr.bf16.mxu0 0
        %362 = vmatpush1.bf16.msra.mxu0 0
        %363 = vmatprep.subr.bf16.mxu0 0
        %364 = vmatpush1.bf16.msra.mxu0 0
        %365 = vmatprep.subr.bf16.mxu0 0
        %366 = vmatpush1.bf16.msra.mxu0 0
        %367 = vmatprep.subr.bf16.mxu0 0
        %368 = vmatpush1.bf16.msra.mxu0 0
        %369 = vmatprep.subr.bf16.mxu0 0
        %370 = vmatpush1.bf16.msra.mxu0 0
        %371 = vmatprep.subr.bf16.mxu0 0
        %372 = vmatpush1.bf16.msra.mxu0 %v355
        %373 = vmatprep.subr.bf16.mxu0 0
        %374 = vmatpush2.bf16.msra.mxu0 0
        %375 = vmatprep.subr.bf16.mxu0 0
        %376 = vmatpush2.bf16.msra.mxu0 0
        %377 = vmatprep.subr.bf16.mxu0 0
        %378 = vmatpush2.bf16.msra.mxu0 0
        %379 = vmatprep.subr.bf16.mxu0 0
        %380 = vmatpush2.bf16.msra.mxu0 0
        %381 = vmatprep.subr.bf16.mxu0 0
        %382 = vmatpush2.bf16.msra.mxu0 0
        %383 = vmatprep.subr.bf16.mxu0 0
        %384 = vmatpush2.bf16.msra.mxu0 0
        %385 = vmatprep.subr.bf16.mxu0 0
        %386 = vmatpush2.bf16.msra.mxu0 0
        %387 = vmatprep.subr.bf16.mxu0 0
        %388 = vmatpush2.bf16.msra.mxu0 0
        %389 = vmatprep.mubr.bf16.mxu0 0
        %390 = vmatmul.mubr.bf16.gmra.mxu0 %v350
        %v391 = vpop.f32.mrf.mxu0
        %v392 = vadd.f32 %v346, %v391
        %v393 = vpop.f32.mrf.mxu0
        %v394 = vpop.f32.mrf.mxu0
        %v395 = vpop.f32.mrf.mxu0
        %396 = vdwg.mxu0
        %vm397 = vcmp.gt.f32.partialorder %v392, 0.0
        %v398 = vmul.f32 %v392, 0.1
        %v399 = vsel %vm397, %v392, %v398
        %400 = vst [vmem:[%s236] sm:$0xff] %v399
        %s401 = sand.u32 %s140, 1
        %s402 = scalar_lea.sflag [#allocation3], %s401
        %s403 = sand.u32 %s140, 1
        %s404 = smul.addr %s403, 8
        %s405 = scalar_lea.vmem [#allocation2], %s404
        // Predicated region
        $region37: #{tpu_custom_call.1} parent=35 // pred_check
          %p406 = pneg %p150
        $region38: #{tpu_custom_call.1} parent=35 // pred_check_branch
          %408 = sbr.rel (%p406) target = $region40
        $region39: #{tpu_custom_call.1} parent=35 // pred_region
          %s410 = ssub.s32 128, 128
          %411 = vsyncadd %s402, %s410
          %s412 = sadd.s32 %s23, %s22
          %s413 = smul.addr %s412, 128
          %s414 = scalar_lea.hbm %s4, %s413
          %s416 = sshll.u32 %s405, 4
          %s417 = int_to_ptr.vmem [resolvable:$true] %s416
          %419 = dma.vmem_to_hbm [thread:$0]  %s417, 128, %s414, %s402
        $region40: #{tpu_custom_call.1} parent=35 // pred_fallthru
          _
      $region36: #{tpu_custom_call.1} parent=5 // pred_fallthru
        _
      %p420 = scmp.le.s32.totalorder 2, %s13
      // Predicated region
      $region41: #{tpu_custom_call.1} parent=5 // pred_check
        %p421 = pneg %p420
      $region42: #{tpu_custom_call.1} parent=5 // pred_check_branch
        %423 = sbr.rel (%p421) target = $region44
      $region43: #{tpu_custom_call.1} parent=5 // pred_region
        %s424 = ssub.s32 %s13, 2
        // Predicated region
        $region45: #{tpu_custom_call.1} parent=43 // pred_check
          %p425 = pneg %p156
        $region46: #{tpu_custom_call.1} parent=43 // pred_check_branch
          %427 = sbr.rel (%p425) target = $region48
        $region47: #{tpu_custom_call.1} parent=43 // pred_region
          %s428 = sand.u32 %s141, 1
          %s429 = scalar_lea.sflag [#allocation3], %s428
          %s430 = sand.u32 %s141, 1
          %s431 = smul.addr %s430, 8
          %s432 = scalar_lea.vmem [#allocation2], %s431
          %433 = dma.done %s429, 128
        $region48: #{tpu_custom_call.1} parent=43 // pred_fallthru
          _
      $region44: #{tpu_custom_call.1} parent=5 // pred_fallthru
        _
    $region6: #{tpu_custom_call.1} parent=1 // loop_footer
      %s17 = sadd.s32 1, %s13
    $region7: #{tpu_custom_call.1} parent=1 // loop_footer_branch
      %12 = sbr.rel target = $region3
    $region8: #{tpu_custom_call.1} parent=1 // loop_exit
      _
    %434 = vsyncpa [#allocation3], 1
    %s435 = scalar_lea.sflag [#allocation3], 1
    %436 = vsyncpa %s435, 1

</llo_original>
